<compile_context>
chip_gen: v7x
topology: tpu7x:2x2x1
jax: 0.10.0
libtpu: 0.0.40
codegen_flags: <defaults>
</compile_context>

<pallas_src>
import functools

import numpy as np
import jax
import jax.numpy as jnp
from jax.experimental import pallas as pl
from jax.experimental.pallas import tpu as pltpu


def _round_up(x, m):
    return ((x + m - 1) // m) * m


# ---------------------------------------------------------------------------
# Kernel: one batch tile per grid step, one MXU dot, two direct head stores.
# ---------------------------------------------------------------------------
def _dqn_kernel(x_ref, w_ref, b_ref, out2_ref, pred_ref, *, emb, out_sz):
    # [tb, in] @ [in, emb+out] + [1, emb+out]   (single fused affine map)
    y = (jnp.dot(x_ref[...], w_ref[...], preferred_element_type=jnp.float32)
         + b_ref[...])
    out2_ref[...] = y[:, :emb].astype(out2_ref.dtype)
    pred_ref[...] = y[:, emb:emb + out_sz].astype(pred_ref.dtype)


# ---------------------------------------------------------------------------
# One-time parameter preparation (hoisted out of the per-step forward).
# ---------------------------------------------------------------------------
def prepare_dqn_params(params):
    """Collapse the whole DQN into one affine map (valid: no activation between layers).

    params: dict of (weight, bias) with PyTorch-layout weights [out_features, in_features].
    Returns (w_fused [in, emb+out], b_fused [1, emb+out], emb, out_sz).
    """
    w1, b1 = params["hidden_layer_1"]
    w2, b2 = params["hidden_layer_2"]
    w3, b3 = params["action_pred"]

    w1 = jnp.asarray(w1); b1 = jnp.asarray(b1)
    w2 = jnp.asarray(w2); b2 = jnp.asarray(b2)
    w3 = jnp.asarray(w3); b3 = jnp.asarray(b3)

    emb = int(w2.shape[0])
    out_sz = int(w3.shape[0])

    # Heads fused along the output dim: columns [0:emb) -> out_2, [emb:emb+out) -> pred.
    w_heads = jnp.concatenate([w2.T, w3.T], axis=1)            # [hid, emb+out]
    b_heads = jnp.concatenate([b2, b3], axis=0).reshape(1, -1)  # [1, emb+out]

    # Full algebraic collapse:  y = x @ (W1.T @ Wh) + (b1 @ Wh + bh)
    w_fused = w1.T @ w_heads                                    # [in, emb+out]
    b_fused = b1.reshape(1, -1) @ w_heads + b_heads             # [1, emb+out]

    return w_fused, b_fused, emb, out_sz


# ---------------------------------------------------------------------------
# Forward pass.
# ---------------------------------------------------------------------------
@functools.partial(jax.jit, static_argnames=("emb", "out_sz", "batch_tile"))
def dqn_forward(x, w_fused, b_fused, *, emb, out_sz, batch_tile=1024):
    """x: [B, input_size] float32. Returns (pred [B, out_sz], out_2 [B, emb])."""
    B, in_size = x.shape
    n_heads = w_fused.shape[1]
    assert n_heads == emb + out_sz

    # Balanced, sublane-aligned batch tiles: minimize padding, cap at batch_tile
    # rows, and force >= 2 grid steps for B >= 16 so v7x megacore shards work.
    if B >= 16:
        num_tiles = max(pl.cdiv(B, batch_tile), 2)
    else:
        num_tiles = 1
    tb = _round_up(pl.cdiv(B, num_tiles), 8)
    b_padded = _round_up(B, tb)
    num_tiles = b_padded // tb

    if b_padded != B:
        x = jnp.pad(x, ((0, b_padded - B), (0, 0)))

    itemsize = 4  # float32
    cost = pl.CostEstimate(
        flops=2 * b_padded * in_size * n_heads,
        transcendentals=0,
        bytes_accessed=(b_padded * in_size + in_size * n_heads + n_heads
                        + b_padded * n_heads) * itemsize,
    )

    out2_p, pred_p = pl.pallas_call(
        functools.partial(_dqn_kernel, emb=emb, out_sz=out_sz),
        out_shape=(
            jax.ShapeDtypeStruct((b_padded, emb), x.dtype),
            jax.ShapeDtypeStruct((b_padded, out_sz), x.dtype),
        ),
        grid=(num_tiles,),
        in_specs=[
            # batch-tiled activations
            pl.BlockSpec((tb, in_size), lambda i: (i, 0)),
            # fused weight / bias: whole block, resident across all grid steps
            pl.BlockSpec((in_size, n_heads), lambda i: (0, 0)),
            pl.BlockSpec((1, n_heads), lambda i: (0, 0)),
        ],
        out_specs=(
            pl.BlockSpec((tb, emb), lambda i: (i, 0)),
            pl.BlockSpec((tb, out_sz), lambda i: (i, 0)),
        ),
        compiler_params=pltpu.CompilerParams(
            dimension_semantics=("parallel",),   # megacore sharding on v7x
        ),
        cost_estimate=cost,
    )(x, w_fused, b_fused)

    if b_padded != B:
        out2_p = out2_p[:B]
        pred_p = pred_p[:B]
    return pred_p, out2_p


# ---------------------------------------------------------------------------
# Deterministic synthetic init (PyTorch nn.Linear-like uniform bounds).
# ---------------------------------------------------------------------------
def init_dqn_params(key, input_size, embedding_size, hidden_size, output_size):
    ks = jax.random.split(key, 6)

    def linear(kw, kb, fan_in, fan_out):
        bound = 1.0 / np.sqrt(np.float32(fan_in))
        w = jax.random.uniform(kw, (fan_out, fan_in), jnp.float32, -bound, bound)
        b = jax.random.uniform(kb, (fan_out,), jnp.float32, -bound, bound)
        return w, b

    return {
        "hidden_layer_1": linear(ks[0], ks[1], input_size, hidden_size),
        "hidden_layer_2": linear(ks[2], ks[3], hidden_size, embedding_size),
        "action_pred":    linear(ks[4], ks[5], hidden_size, output_size),
    }


def _reference_forward(x, params):
    """Reference computed in float64 on host (numpy) for a tight, exact baseline."""
    x = np.asarray(x, np.float64)
    w1, b1 = (np.asarray(a, np.float64) for a in params["hidden_layer_1"])
    w2, b2 = (np.asarray(a, np.float64) for a in params["hidden_layer_2"])
    w3, b3 = (np.asarray(a, np.float64) for a in params["action_pred"])
    out_1 = x @ w1.T + b1
    out_2 = out_1 @ w2.T + b2
    pred = out_1 @ w3.T + b3
    return pred, out_2


if __name__ == "__main__":
    # Small shapes consistent with the module's forward.
    batch = 8
    input_size = 32
    hidden_size = 64
    embedding_size = 32
    output_size = 16

    key = jax.random.PRNGKey(0)
    kx, kp = jax.random.split(key)
    x = jax.random.normal(kx, (batch, input_size), jnp.float32)
    params = init_dqn_params(kp, input_size, embedding_size, hidden_size,
                             output_size)

    # One-time parameter prep (full affine collapse of the 3 Linear layers).
    w_fused, b_fused, emb, out_sz = prepare_dqn_params(params)

    pred, out2 = dqn_forward(x, w_fused, b_fused, emb=emb, out_sz=out_sz)
    jax.block_until_ready((pred, out2))

    pred_ref, out2_ref = _reference_forward(x, params)
    assert pred.shape == (batch, output_size)
    assert out2.shape == (batch, embedding_size)
    assert np.allclose(np.asarray(pred), pred_ref, atol=2e-3, rtol=2e-3)
    assert np.allclose(np.asarray(out2), out2_ref, atol=2e-3, rtol=2e-3)

    # Exercise a batch that is not tile-aligned (balanced tiles: 2 x 152 for B=300).
    x_big = jax.random.normal(kx, (300, input_size), jnp.float32)
    pred_b, out2_b = dqn_forward(x_big, w_fused, b_fused, emb=emb, out_sz=out_sz)
    jax.block_until_ready((pred_b, out2_b))
    pred_bref, out2_bref = _reference_forward(x_big, params)
    assert pred_b.shape == (300, output_size)
    assert out2_b.shape == (300, embedding_size)
    assert np.allclose(np.asarray(pred_b), pred_bref, atol=2e-3, rtol=2e-3)
    assert np.allclose(np.asarray(out2_b), out2_bref, atol=2e-3, rtol=2e-3)

    # TODO(synk): play_one's topk/argmax is a trivial host-side op and is not kernelized.
    print("KERNEL_OK")
</pallas_src>

<mosaic_0001>
module attributes {stable_mosaic.version = 11 : i64} {
  func.func @_dqn_kernel(%arg0: i32, %arg1: memref<8x32xf32, #tpu.memory_space<vmem>>, %arg2: memref<32x48xf32, #tpu.memory_space<vmem>>, %arg3: memref<1x48xf32, #tpu.memory_space<vmem>>, %arg4: memref<8x32xf32, #tpu.memory_space<vmem>>, %arg5: memref<8x16xf32, #tpu.memory_space<vmem>>) attributes {dimension_semantics = [#tpu.dimension_semantics<parallel>], iteration_bounds = array<i64: 1>, scalar_prefetch = 0 : i64, scratch_operands = 0 : i64, tpu.core_type = #tpu.core_type<tc>, window_params = [{transform_indices = @transform_0, window_bounds = array<i64: 8, 32>}, {pipeline_mode = #tpu.pipeline_mode<synchronous>, transform_indices = @transform_1, window_bounds = array<i64: 32, 48>}, {pipeline_mode = #tpu.pipeline_mode<synchronous>, transform_indices = @transform_2, window_bounds = array<i64: 1, 48>}, {transform_indices = @transform_3, window_bounds = array<i64: 8, 32>}, {transform_indices = @transform_4, window_bounds = array<i64: 8, 16>}]} {
    %c0 = arith.constant 0 : index
    %c0_0 = arith.constant 0 : index
    %0 = vector.load %arg1[%c0, %c0_0] : memref<8x32xf32, #tpu.memory_space<vmem>>, vector<8x32xf32>
    %c0_1 = arith.constant 0 : index
    %c0_2 = arith.constant 0 : index
    %1 = vector.load %arg2[%c0_1, %c0_2] : memref<32x48xf32, #tpu.memory_space<vmem>>, vector<32x48xf32>
    %cst = arith.constant dense<0.000000e+00> : vector<8x48xf32>
    %2 = tpu.matmul %0, %1, %cst {dimension_numbers = #tpu.dot_dimension_numbers<[1], [0], [0], [1], [0, 0, 1, 1], [], []>} : vector<8x32xf32>, vector<32x48xf32>, vector<8x48xf32> -> vector<8x48xf32>
    %c0_3 = arith.constant 0 : index
    %c0_4 = arith.constant 0 : index
    %3 = vector.load %arg3[%c0_3, %c0_4] : memref<1x48xf32, #tpu.memory_space<vmem>>, vector<1x48xf32>
    %4 = vector.broadcast %3 : vector<1x48xf32> to vector<8x48xf32>
    %5 = arith.addf %2, %4 : vector<8x48xf32>
    %6 = vector.extract_strided_slice %5 {offsets = [0, 0], sizes = [8, 32], strides = [1, 1]} : vector<8x48xf32> to vector<8x32xf32>
    %c0_5 = arith.constant 0 : index
    %c0_6 = arith.constant 0 : index
    %7 = vector.load %arg4[%c0_5, %c0_6] : memref<8x32xf32, #tpu.memory_space<vmem>>, vector<8x32xf32>
    tpu.vector_store %arg4[%c0_5, %c0_6], %6 {strides = array<i32>} : memref<8x32xf32, #tpu.memory_space<vmem>>, vector<8x32xf32>,
    %8 = vector.extract_strided_slice %5 {offsets = [0, 32], sizes = [8, 16], strides = [1, 1]} : vector<8x48xf32> to vector<8x16xf32>
    %c0_7 = arith.constant 0 : index
    %c0_8 = arith.constant 0 : index
    %9 = vector.load %arg5[%c0_7, %c0_8] : memref<8x16xf32, #tpu.memory_space<vmem>>, vector<8x16xf32>
    tpu.vector_store %arg5[%c0_7, %c0_8], %8 {strides = array<i32>} : memref<8x16xf32, #tpu.memory_space<vmem>>, vector<8x16xf32>,
    return
  }
  func.func @transform_0(%arg0: i32) -> (i32, i32) {
    %c0_i32 = arith.constant 0 : i32
    %c0_i32_0 = arith.constant 0 : i32
    return %arg0, %c0_i32 : i32, i32
  }
  func.func @transform_1(%arg0: i32) -> (i32, i32) {
    %c0_i32 = arith.constant 0 : i32
    %c0_i32_0 = arith.constant 0 : i32
    %c0_i32_1 = arith.constant 0 : i32
    return %c0_i32, %c0_i32_0 : i32, i32
  }
  func.func @transform_2(%arg0: i32) -> (i32, i32) {
    %c0_i32 = arith.constant 0 : i32
    %c0_i32_0 = arith.constant 0 : i32
    %c0_i32_1 = arith.constant 0 : i32
    return %c0_i32, %c0_i32_0 : i32, i32
  }
  func.func @transform_3(%arg0: i32) -> (i32, i32) {
    %c0_i32 = arith.constant 0 : i32
    %c0_i32_0 = arith.constant 0 : i32
    return %arg0, %c0_i32 : i32, i32
  }
  func.func @transform_4(%arg0: i32) -> (i32, i32) {
    %c0_i32 = arith.constant 0 : i32
    %c0_i32_0 = arith.constant 0 : i32
    return %arg0, %c0_i32 : i32, i32
  }
}

</mosaic_0001>

<llo_original>
// kernel: dqn_forward.1
$region0: #{dqn_forward.1}
  #allocation0 [shape = 'u32[]', space=smem, size = 0x4, offset = 0x4, fixed_abs, tag = 'smem constant byte address 0x4 - core index']
  #allocation1 [shape = 'u32[144,128]{1,0:T(1,128)}', space=vmem, size = 0x12000, scoped, tag = 'internal scratch']
  %s0 = inlined_call_operand.hbm [shape: f32[8,32], index: 0, kind: input, shape index: {}]
  %s1 = inlined_call_operand.hbm [shape: f32[32,48], index: 1, kind: input, shape index: {}]
  %s2 = inlined_call_operand.vmem [shape: f32[1,48], index: 2, kind: input, shape index: {}]
  %s3 = inlined_call_operand.hbm [shape: f32[8,32], index: 3, kind: output, shape index: {0}]
  %s4 = inlined_call_operand.hbm [shape: f32[8,16], index: 4, kind: output, shape index: {1}]
  %5 = xla_tuple %s3, %s4
  %s6 = sld [smem:[#allocation0]]
  $region38: #{dqn_forward.1} parent=0
    _
  %s8 = ssub.s32 1, %s6
  %s9 = scalar_select 0, %s8, %s6
  $region1: #{dqn_forward.1} parent=0
    #allocation2 [shape = 'u8[4096]{0}', space=vmem, size = 0x1000, scoped, tag = 'input window, operand 0, single buffered']
    #allocation3 [shape = 's32[1]{0}', space=sflag, size = 0x4, scoped, tag = 'scoped memory for dqn_forward.1']
    #allocation4 [shape = 's32[1]{0}', space=sflag, size = 0x4, scoped, tag = 'scoped memory for dqn_forward.1']
    #allocation5 [shape = 'u8[16384]{0}', space=vmem, size = 0x4000, scoped, tag = 'input window, operand 1, single buffered']
    #allocation6 [shape = 's32[1]{0}', space=sflag, size = 0x4, scoped, tag = 'scoped memory for dqn_forward.1']
    #allocation7 [shape = 'u8[4096]{0}', space=vmem, size = 0x1000, scoped, tag = 'output window, operand 0, single buffered']
    #allocation8 [shape = 'u8[4096]{0}', space=vmem, size = 0x1000, scoped, tag = 'output window, operand 1, single buffered']
    #allocation9 [shape = 's32[1]{0}', space=sflag, size = 0x4, scoped, tag = 'scoped memory for dqn_forward.1']
    %10 = vsyncpa [#allocation3], 0
    %11 = vsyncpa [#allocation6], 0
    %12 = vsyncpa [#allocation4], 0
    %13 = vsyncpa [#allocation9], 0
    // Predicated region
    $region2: #{dqn_forward.1} parent=1 // pred_check
      _
    $region3: #{dqn_forward.1} parent=1 // pred_check_branch
      %15 = sbr.rel (0) target = $region5
    $region4: #{dqn_forward.1} parent=1 // pred_region
      %s17 = ssub.s32 128, 128
      %18 = vsyncadd [#allocation3], %s17
      %s20 = sshll.u32 [#allocation2], 4
      %s21 = int_to_ptr.vmem [resolvable:$true] %s20
      %23 = dma.hbm_to_vmem [thread:$0]  %s0, 128, %s21, [#allocation3]
    $region5: #{dqn_forward.1} parent=1 // pred_fallthru
      _
    // Predicated region
    $region6: #{dqn_forward.1} parent=1 // pred_check
      _
    $region7: #{dqn_forward.1} parent=1 // pred_check_branch
      %25 = sbr.rel (0) target = $region9
    $region8: #{dqn_forward.1} parent=1 // pred_region
      %s27 = ssub.s32 512, 512
      %28 = vsyncadd [#allocation6], %s27
      %s29 = sshll.u32 [#allocation5], 4
      %s30 = int_to_ptr.vmem [resolvable:$true] %s29
      %35 = dma.hbm_to_vmem [thread:$0]  %s1, 512, %s30, [#allocation6], 128, 128, 8
    $region9: #{dqn_forward.1} parent=1 // pred_fallthru
      _
    // Predicated region
    $region10: #{dqn_forward.1} parent=1 // pred_check
      _
    $region11: #{dqn_forward.1} parent=1 // pred_check_branch
      %37 = sbr.rel (0) target = $region13
    $region12: #{dqn_forward.1} parent=1 // pred_region
      _
    $region13: #{dqn_forward.1} parent=1 // pred_fallthru
      _
    // Predicated region
    $region14: #{dqn_forward.1} parent=1 // pred_check
      _
    $region15: #{dqn_forward.1} parent=1 // pred_check_branch
      %39 = sbr.rel (0) target = $region17
    $region16: #{dqn_forward.1} parent=1 // pred_region
      %40 = dma.done [#allocation3], 128
    $region17: #{dqn_forward.1} parent=1 // pred_fallthru
      _
    // Predicated region
    $region18: #{dqn_forward.1} parent=1 // pred_check
      _
    $region19: #{dqn_forward.1} parent=1 // pred_check_branch
      %42 = sbr.rel (0) target = $region21
    $region20: #{dqn_forward.1} parent=1 // pred_region
      %43 = dma.done [#allocation6], 512
    $region21: #{dqn_forward.1} parent=1 // pred_fallthru
      _
    %v44 = vld [vmem:[#allocation2] sm:$0xff]
    %v45 = vld [vmem:[#allocation5] sm:$0xff]
    %v46 = vld [vmem:[#allocation5 + $0x8] sm:$0xff]
    %v47 = vld [vmem:[#allocation5 + $0x10] sm:$0xff]
    %v48 = vld [vmem:[#allocation5 + $0x18] sm:$0xff]
    %v49 = vld [vmem:[%s2] sm:$0x1]
    %v51 = vlaneseq
    %v52 = vshrl.u32 %v51, 7
    %v53 = vsub.s32 0, %v52
    %v54 = vrot.slane %v49, %v53
    %vm56 = vcmask 261120
    %v58 = vsel %vm56, %v44, 0
    %60 = vmatprep.subr.mxu0 0.0
    %61 = vmatpush1.msra.mxu0 %v45
    %62 = vmatprep.subr.mxu0 0.0
    %63 = vmatpush1.msra.mxu0 %v46
    %64 = vmatprep.subr.mxu0 0.0
    %65 = vmatpush1.msra.mxu0 %v47
    %66 = vmatprep.subr.mxu0 0.0
    %67 = vmatpush1.msra.mxu0 %v48
    %68 = vmatprep.subr.mxu0 0.0
    %69 = vmatpush1.msra.mxu0 0.0
    %70 = vmatprep.subr.mxu0 0.0
    %71 = vmatpush1.msra.mxu0 0.0
    %72 = vmatprep.subr.mxu0 0.0
    %73 = vmatpush1.msra.mxu0 0.0
    %74 = vmatprep.subr.mxu0 0.0
    %75 = vmatpush1.msra.mxu0 0.0
    %76 = vmatprep.subr.mxu0 0.0
    %77 = vmatpush1.msra.mxu0 0.0
    %78 = vmatprep.subr.mxu0 0.0
    %79 = vmatpush1.msra.mxu0 0.0
    %80 = vmatprep.subr.mxu0 0.0
    %81 = vmatpush1.msra.mxu0 0.0
    %82 = vmatprep.subr.mxu0 0.0
    %83 = vmatpush1.msra.mxu0 0.0
    %84 = vmatprep.subr.mxu0 0.0
    %85 = vmatpush1.msra.mxu0 0.0
    %86 = vmatprep.subr.mxu0 0.0
    %87 = vmatpush1.msra.mxu0 0.0
    %88 = vmatprep.subr.mxu0 0.0
    %89 = vmatpush1.msra.mxu0 0.0
    %90 = vmatprep.subr.mxu0 0.0
    %91 = vmatpush1.msra.mxu0 0.0
    %92 = vmatprep.subr.mxu0 0.0
    %93 = vmatpush1.msra.mxu0 0.0
    %94 = vmatprep.subr.mxu0 0.0
    %95 = vmatpush1.msra.mxu0 0.0
    %96 = vmatprep.subr.mxu0 0.0
    %97 = vmatpush1.msra.mxu0 0.0
    %98 = vmatprep.subr.mxu0 0.0
    %99 = vmatpush1.msra.mxu0 0.0
    %100 = vmatprep.subr.mxu0 0.0
    %101 = vmatpush1.msra.mxu0 0.0
    %102 = vmatprep.subr.mxu0 0.0
    %103 = vmatpush1.msra.mxu0 0.0
    %104 = vmatprep.subr.mxu0 0.0
    %105 = vmatpush1.msra.mxu0 0.0
    %106 = vmatprep.subr.mxu0 0.0
    %107 = vmatpush1.msra.mxu0 0.0
    %108 = vmatprep.subr.mxu0 0.0
    %109 = vmatpush1.msra.mxu0 0.0
    %110 = vmatprep.subr.mxu0 0.0
    %111 = vmatpush1.msra.mxu0 0.0
    %112 = vmatprep.subr.mxu0 0.0
    %113 = vmatpush1.msra.mxu0 0.0
    %114 = vmatprep.subr.mxu0 0.0
    %115 = vmatpush1.msra.mxu0 0.0
    %116 = vmatprep.subr.mxu0 0.0
    %117 = vmatpush1.msra.mxu0 0.0
    %118 = vmatprep.subr.mxu0 0.0
    %119 = vmatpush1.msra.mxu0 0.0
    %120 = vmatprep.subr.mxu0 0.0
    %121 = vmatpush1.msra.mxu0 0.0
    %122 = vmatprep.subr.mxu0 0.0
    %123 = vmatpush1.msra.mxu0 0.0
    %124 = vmatprep.mubr.f32.mxu0 0.0
    %125 = vmatmul.mubr.f32.gmra.mrb[0].mxu0 %v58
    %v126 = vpop.f32.mrb[0].mxu0
    %v127 = vadd.f32 %v54, %v126
    %v128 = vpop.f32.mrb[0].mxu0
    %129 = vdwg.mxu0
    %130 = vst.msk [vmem:[#allocation7] sm:$0xff] %vm56, %v127
    %132 = vrot.lane.b32.xlu0 %v127, 96
    %v133 = vpop.permute.xlu0 %132
    %vm135 = vcmask 130048
    %136 = vst.msk [vmem:[#allocation8] sm:$0xff] %vm135, %v133
    // Predicated region
    $region22: #{dqn_forward.1} parent=1 // pred_check
      _
    $region23: #{dqn_forward.1} parent=1 // pred_check_branch
      %138 = sbr.rel (0) target = $region25
    $region24: #{dqn_forward.1} parent=1 // pred_region
      %s140 = ssub.s32 128, 128
      %141 = vsyncadd [#allocation4], %s140
      %s143 = sshll.u32 [#allocation7], 4
      %s144 = int_to_ptr.vmem [resolvable:$true] %s143
      %146 = dma.vmem_to_hbm [thread:$0]  %s144, 128, %s3, [#allocation4]
    $region25: #{dqn_forward.1} parent=1 // pred_fallthru
      _
    // Predicated region
    $region26: #{dqn_forward.1} parent=1 // pred_check
      _
    $region27: #{dqn_forward.1} parent=1 // pred_check_branch
      %148 = sbr.rel (0) target = $region29
    $region28: #{dqn_forward.1} parent=1 // pred_region
      %s150 = ssub.s32 128, 128
      %151 = vsyncadd [#allocation9], %s150
      %s153 = sshll.u32 [#allocation8], 4
      %s154 = int_to_ptr.vmem [resolvable:$true] %s153
      %156 = dma.vmem_to_hbm [thread:$0]  %s154, 128, %s4, [#allocation9]
    $region29: #{dqn_forward.1} parent=1 // pred_fallthru
      _
    // Predicated region
    $region30: #{dqn_forward.1} parent=1 // pred_check
      _
    $region31: #{dqn_forward.1} parent=1 // pred_check_branch
      %158 = sbr.rel (0) target = $region33
    $region32: #{dqn_forward.1} parent=1 // pred_region
      %159 = dma.done [#allocation4], 128
    $region33: #{dqn_forward.1} parent=1 // pred_fallthru
      _
    // Predicated region
    $region34: #{dqn_forward.1} parent=1 // pred_check
      _
    $region35: #{dqn_forward.1} parent=1 // pred_check_branch
      %161 = sbr.rel (0) target = $region37
    $region36: #{dqn_forward.1} parent=1 // pred_region
      %162 = dma.done [#allocation9], 128
    $region37: #{dqn_forward.1} parent=1 // pred_fallthru
      _
    %163 = vsyncpa [#allocation3], 1
    %164 = vsyncpa [#allocation6], 1
    %165 = vsyncpa [#allocation4], 1
    %166 = vsyncpa [#allocation9], 1

</llo_original>
